<compile_context>
chip_gen: v7x
topology: tpu7x:2x2x1
jax: 0.10.0
libtpu: 0.0.40
codegen_flags: <defaults>
</compile_context>

<pallas_src>
import functools
import math

import jax
import jax.numpy as jnp
from jax import lax
from jax.experimental import pallas as pl
from jax.experimental.pallas import tpu as pltpu


def _round_up(a, b):
    return (a + b - 1) // b * b


def _tpu_generation():
    """Best-effort TPU generation detection ('v5' / 'v6' / 'v7' / None)."""
    try:
        kind = jax.devices()[0].device_kind.lower()
    except Exception:
        return None
    if "v5" in kind:
        return "v5"
    if "v6" in kind:
        return "v6"
    if "v7" in kind or "7x" in kind:
        return "v7"
    return None


def _physical_vmem_bytes():
    try:
        return int(pltpu.get_tpu_info().vmem_capacity_bytes)
    except Exception:
        return 64 * 1024 * 1024  # conservative (v7x per-TC size)


def _gap1d_kernel(x_ref, o_ref, acc_ref, *, k, inv_l, n_rows, tl, need_mask):
    # x_ref:   (TB, TL, k*C) tile of the (row-major reshaped) input.
    # o_ref:   (TB, C) output tile (same block across the L grid axis).
    # acc_ref: (TB, k*C) f32 accumulator scratch (persists across grid steps).
    l_idx = pl.program_id(1)

    @pl.when(l_idx == 0)
    def _init():
        acc_ref[...] = jnp.zeros_like(acc_ref)

    x = x_ref[...]
    if need_mask:
        # Zero out-of-range rows of a partial last L tile (OOB block region
        # holds undefined data; it must not leak into valid batch rows).
        row = lax.broadcasted_iota(jnp.int32, x.shape, 1)
        x = jnp.where(row + l_idx * tl < n_rows, x, jnp.zeros_like(x))

    # Partial sum over this L tile, accumulated in f32.
    acc_ref[...] += jnp.sum(x, axis=1, dtype=jnp.float32)

    @pl.when(l_idx == pl.num_programs(1) - 1)
    def _finalize():
        c = o_ref.shape[-1]
        s = acc_ref[...]           # (TB, k*C) lane-packed partial sums
        kk = k
        while kk > 1:              # log2(k) halving tree (k is a power of 2)
            half = (kk // 2) * c
            s = s[:, :half] + s[:, half:]
            kk //= 2
        o_ref[...] = (s * inv_l).astype(o_ref.dtype)


def gap1d(x, *, vmem_buffer_bytes=None, buffer_count=None):
    """Mean over axis 1 of a [B, L, C] array (== torch ``x.mean(1)``)."""
    B, L, C = x.shape
    dtype = x.dtype
    itemsize = jnp.dtype(dtype).itemsize
    # dtype-aware sublane multiple: 8 (f32), 16 (bf16/f16), 32 (int8/fp8).
    m = max(8, 32 // itemsize)

    gen = _tpu_generation()
    if vmem_buffer_bytes is None:
        vmem_buffer_bytes = {"v5": 4 << 20, "v6": 8 << 20, "v7": 12 << 20}.get(
            gen, 8 << 20)
    if buffer_count is None:
        buffer_count = 3 if gen == "v7" else 2

    # ---- Lane densification (unconditional): view [B, L, C] as [B, Lw, k*C]
    # so tiles are (near-)128-lane dense.  Zero-pad L if k doesn't divide it.
    k = 1
    if C % 128 != 0:
        k = 128 // math.gcd(C, 128)          # power of 2; k*C = lcm(C, 128)
    tb_est = 8 if B >= 8 else max(1, B)
    # Keep even a minimal (TB, m, k*C) tile inside the streaming budget.
    while k > 1 and tb_est * m * (k * C) * itemsize > vmem_buffer_bytes:
        k //= 2
    Lp = _round_up(L, k)
    if Lp != L:
        x = jnp.pad(x, ((0, 0), (0, Lp - L), (0, 0)))   # zeros: sum unchanged
    Cw = k * C
    Lw = Lp // k
    xw = x.reshape(B, Lw, Cw)

    # ---- Fold part of the L reduction into the batch axis so the parallel
    # grid axis has >=2 blocks (keeps both v7x TensorCores busy).
    g = 1
    if B < 16 and Lw >= 2 * m:
        cand = 1
        while B * cand < 16:
            cand *= 2
        if Lw % cand == 0 and (Lw // cand) >= m:
            g = cand
    Bw = B * g
    Lw2 = Lw // g
    if g > 1:
        xw = xw.reshape(Bw, Lw2, Cw)        # free row-major reshape

    TB = 8 if Bw >= 8 else Bw               # multiple of 8, or the full dim
    grid_b = pl.cdiv(Bw, TB)

    # ---- L tile from the per-buffer budget, using the lane-PADDED width.
    lane_w = _round_up(Cw, 128)
    row_bytes = TB * lane_w * itemsize
    cap = max(m, vmem_buffer_bytes // max(1, row_bytes))
    if Lw2 <= cap:
        TL = Lw2                             # whole (reshaped) sequence
    else:
        TL = max(m, (cap // m) * m)          # dtype-aware sublane alignment
    grid_l = pl.cdiv(Lw2, TL)
    need_mask = (Lw2 % TL) != 0

    inv_l = 1.0 / L                          # divide by the TRUE length
    out_dtype = dtype if g == 1 else jnp.float32
    kernel = functools.partial(_gap1d_kernel, k=k, inv_l=inv_l,
                               n_rows=Lw2, tl=TL, need_mask=need_mask)

    vmem_limit = min(
        max(32 << 20, buffer_count * vmem_buffer_bytes + (8 << 20)),
        max(16 << 20, _physical_vmem_bytes() - (16 << 20)),
    )

    def build(nbuf):
        spec_kwargs = {}
        if nbuf != 2:
            spec_kwargs["pipeline_mode"] = pl.Buffered(nbuf)
        in_spec = pl.BlockSpec((TB, TL, Cw), lambda b, l: (b, l, 0),
                               **spec_kwargs)
        return pl.pallas_call(
            kernel,
            out_shape=jax.ShapeDtypeStruct((Bw, C), out_dtype),
            grid_spec=pltpu.PrefetchScalarGridSpec(
                num_scalar_prefetch=0,
                grid=(grid_b, grid_l),
                in_specs=[in_spec],
                out_specs=pl.BlockSpec((TB, C), lambda b, l: (b, 0)),
                scratch_shapes=[pltpu.VMEM((TB, Cw), jnp.float32)],
            ),
            compiler_params=pltpu.CompilerParams(
                dimension_semantics=("parallel", "arbitrary"),
                vmem_limit_bytes=vmem_limit,
            ),
            cost_estimate=pl.CostEstimate(
                flops=Bw * Lw2 * Cw,
                transcendentals=0,
                bytes_accessed=(B * Lp * C + Bw * C) * itemsize,
            ),
        )

    try:
        part = build(buffer_count)(xw)
    except Exception:
        if buffer_count == 2:
            raise
        part = build(2)(xw)                  # fall back to default 2 buffers

    if g == 1:
        return part                          # already the mean, in x.dtype
    # Combine the g per-batch partial means (each already scaled by 1/L).
    return part.reshape(B, g, C).sum(axis=1).astype(dtype)


if __name__ == "__main__":
    key0, key1, key2 = jax.random.split(jax.random.PRNGKey(0), 3)

    # 1) Primary small test (same shape family as the module's forward).
    B, L, C = 2, 8, 32
    x = jax.random.normal(key0, (B, L, C), dtype=jnp.float32)
    out = gap1d(x)
    jax.block_until_ready(out)
    ref = jnp.mean(x, axis=1)
    assert out.shape == (B, C) and out.dtype == x.dtype
    assert jnp.allclose(out, ref, atol=1e-5, rtol=1e-5)

    # 2) Odd shape + tiny streaming budget: exercises zero-padding of L,
    #    lane densification, the batch-fold (megacore) path, cdiv tiling and
    #    the in-kernel mask for a partial last L tile.
    B2, L2, C2 = 3, 637, 7
    x2 = jax.random.normal(key1, (B2, L2, C2), dtype=jnp.float32)
    out2 = gap1d(x2, vmem_buffer_bytes=4096)
    jax.block_until_ready(out2)
    ref2 = jnp.mean(x2, axis=1)
    assert out2.shape == (B2, C2)
    assert jnp.allclose(out2, ref2, atol=1e-4, rtol=1e-4)

    # 3) Batch not a multiple of 8: exercises the partial B block path.
    B3, L3, C3 = 11, 24, 16
    x3 = jax.random.normal(key2, (B3, L3, C3), dtype=jnp.float32)
    out3 = gap1d(x3)
    jax.block_until_ready(out3)
    ref3 = jnp.mean(x3, axis=1)
    assert out3.shape == (B3, C3)
    assert jnp.allclose(out3, ref3, atol=1e-5, rtol=1e-5)

    print("KERNEL_OK")
</pallas_src>

<mosaic_0001>
module attributes {stable_mosaic.version = 11 : i64} {
  func.func @_gap1d_kernel(%arg0: i32, %arg1: i32, %arg2: memref<2x2x128xf32, #tpu.memory_space<vmem>>, %arg3: memref<2x32xf32, #tpu.memory_space<vmem>>, %arg4: memref<2x128xf32, #tpu.memory_space<vmem>>) attributes {dimension_semantics = [#tpu.dimension_semantics<parallel>, #tpu.dimension_semantics<arbitrary>], iteration_bounds = array<i64: 1, 1>, scalar_prefetch = 0 : i64, scratch_operands = 1 : i64, tpu.core_type = #tpu.core_type<tc>, window_params = [{transform_indices = @transform_0, window_bounds = array<i64: 2, 2, 128>}, {transform_indices = @transform_1, window_bounds = array<i64: 2, 32>}]} {
    %c0_i32 = arith.constant 0 : i32
    %0 = arith.cmpi eq, %arg1, %c0_i32 : i32
    %1 = arith.extui %0 : i1 to i32
    %c0_i32_0 = arith.constant 0 : i32
    %2 = arith.cmpi ne, %1, %c0_i32_0 : i32
    scf.if %2 {
      %cst_9 = arith.constant 0.000000e+00 : f32
      %11 = vector.broadcast %cst_9 : f32 to vector<2x128xf32>
      %c0_10 = arith.constant 0 : index
      %c0_11 = arith.constant 0 : index
      %12 = vector.load %arg4[%c0_10, %c0_11] : memref<2x128xf32, #tpu.memory_space<vmem>>, vector<2x128xf32>
      tpu.vector_store %arg4[%c0_10, %c0_11], %11 {strides = array<i32>} : memref<2x128xf32, #tpu.memory_space<vmem>>, vector<2x128xf32>,
    } else {
    }
    %c0 = arith.constant 0 : index
    %c0_1 = arith.constant 0 : index
    %c0_2 = arith.constant 0 : index
    %3 = vector.load %arg2[%c0, %c0_1, %c0_2] : memref<2x2x128xf32, #tpu.memory_space<vmem>>, vector<2x2x128xf32>
    %c0_3 = arith.constant 0 : index
    %c0_4 = arith.constant 0 : index
    %4 = vector.load %arg4[%c0_3, %c0_4] : memref<2x128xf32, #tpu.memory_space<vmem>>, vector<2x128xf32>
    %cst = arith.constant dense<0.000000e+00> : vector<2x128xf32>
    %5 = vector.multi_reduction <add>, %3, %cst [1] : vector<2x2x128xf32> to vector<2x128xf32>
    %6 = arith.addf %4, %5 : vector<2x128xf32>
    %c0_5 = arith.constant 0 : index
    %c0_6 = arith.constant 0 : index
    %7 = vector.load %arg4[%c0_5, %c0_6] : memref<2x128xf32, #tpu.memory_space<vmem>>, vector<2x128xf32>
    tpu.vector_store %arg4[%c0_5, %c0_6], %6 {strides = array<i32>} : memref<2x128xf32, #tpu.memory_space<vmem>>, vector<2x128xf32>,
    %c0_i32_7 = arith.constant 0 : i32
    %8 = arith.cmpi eq, %arg1, %c0_i32_7 : i32
    %9 = arith.extui %8 : i1 to i32
    %c0_i32_8 = arith.constant 0 : i32
    %10 = arith.cmpi ne, %9, %c0_i32_8 : i32
    scf.if %10 {
      %c0_9 = arith.constant 0 : index
      %c0_10 = arith.constant 0 : index
      %11 = vector.load %arg4[%c0_9, %c0_10] : memref<2x128xf32, #tpu.memory_space<vmem>>, vector<2x128xf32>
      %12 = vector.extract_strided_slice %11 {offsets = [0, 0], sizes = [2, 64], strides = [1, 1]} : vector<2x128xf32> to vector<2x64xf32>
      %13 = vector.extract_strided_slice %11 {offsets = [0, 64], sizes = [2, 64], strides = [1, 1]} : vector<2x128xf32> to vector<2x64xf32>
      %14 = arith.addf %12, %13 : vector<2x64xf32>
      %15 = vector.extract_strided_slice %14 {offsets = [0, 0], sizes = [2, 32], strides = [1, 1]} : vector<2x64xf32> to vector<2x32xf32>
      %16 = vector.extract_strided_slice %14 {offsets = [0, 32], sizes = [2, 32], strides = [1, 1]} : vector<2x64xf32> to vector<2x32xf32>
      %17 = arith.addf %15, %16 : vector<2x32xf32>
      %cst_11 = arith.constant 1.250000e-01 : f32
      %18 = vector.broadcast %cst_11 : f32 to vector<2x32xf32>
      %19 = arith.mulf %17, %18 : vector<2x32xf32>
      %c0_12 = arith.constant 0 : index
      %c0_13 = arith.constant 0 : index
      %20 = vector.load %arg3[%c0_12, %c0_13] : memref<2x32xf32, #tpu.memory_space<vmem>>, vector<2x32xf32>
      tpu.vector_store %arg3[%c0_12, %c0_13], %19 {strides = array<i32>} : memref<2x32xf32, #tpu.memory_space<vmem>>, vector<2x32xf32>,
    } else {
    }
    return
  }
  func.func @transform_0(%arg0: i32, %arg1: i32) -> (i32, i32, i32) {
    %c0_i32 = arith.constant 0 : i32
    %c0_i32_0 = arith.constant 0 : i32
    return %arg0, %arg1, %c0_i32 : i32, i32, i32
  }
  func.func @transform_1(%arg0: i32, %arg1: i32) -> (i32, i32) {
    %c0_i32 = arith.constant 0 : i32
    %c0_i32_0 = arith.constant 0 : i32
    return %arg0, %c0_i32 : i32, i32
  }
}

</mosaic_0001>

<llo_original>
// kernel: tpu_custom_call.1
$region0: #{tpu_custom_call.1}
  #allocation0 [shape = 'u32[]', space=smem, size = 0x4, offset = 0x4, fixed_abs, tag = 'smem constant byte address 0x4 - core index']
  #allocation1 [shape = 'u32[144,128]{1,0:T(1,128)}', space=vmem, size = 0x12000, scoped, tag = 'internal scratch']
  #allocation2 [shape = 'f32[2,128]{1,0:T(2,128)}', space=vmem, size = 0x400, scoped, tag = 'scratch operand']
  %s0 = inlined_call_operand.hbm [shape: f32[2,2,128], index: 0, kind: input, shape index: {}]
  %s1 = inlined_call_operand.hbm [shape: f32[2,32], index: 1, kind: output, shape index: {}]
  %s2 = sld [smem:[#allocation0]]
  $region26: #{tpu_custom_call.1} parent=0
    _
  %s4 = ssub.s32 1, %s2
  %s5 = scalar_select 0, %s4, %s2
  $region1: #{tpu_custom_call.1} parent=0
    #allocation3 [shape = 'u8[2048]{0}', space=vmem, size = 0x800, scoped, tag = 'input window, operand 0, single buffered']
    #allocation4 [shape = 's32[1]{0}', space=sflag, size = 0x4, scoped, tag = 'scoped memory for tpu_custom_call.1']
    #allocation5 [shape = 's32[1]{0}', space=sflag, size = 0x4, scoped, tag = 'scoped memory for tpu_custom_call.1']
    #allocation6 [shape = 'u8[1024]{0}', space=vmem, size = 0x400, scoped, tag = 'output window, operand 0, single buffered']
    %6 = vsyncpa [#allocation4], 0
    %7 = vsyncpa [#allocation5], 0
    // Predicated region
    $region2: #{tpu_custom_call.1} parent=1 // pred_check
      _
    $region3: #{tpu_custom_call.1} parent=1 // pred_check_branch
      %9 = sbr.rel (0) target = $region5
    $region4: #{tpu_custom_call.1} parent=1 // pred_region
      %s11 = ssub.s32 64, 64
      %12 = vsyncadd [#allocation4], %s11
      %s13 = sshll.u32 [#allocation3], 4
      %s14 = int_to_ptr.vmem [resolvable:$true] %s13
      %19 = dma.hbm_to_vmem [thread:$0]  %s0, 64, %s14, [#allocation4], 32, 32, 2
    $region5: #{tpu_custom_call.1} parent=1 // pred_fallthru
      _
    // Predicated region
    $region6: #{tpu_custom_call.1} parent=1 // pred_check
      _
    $region7: #{tpu_custom_call.1} parent=1 // pred_check_branch
      %21 = sbr.rel (0) target = $region9
    $region8: #{tpu_custom_call.1} parent=1 // pred_region
      %22 = dma.done [#allocation4], 64
    $region9: #{tpu_custom_call.1} parent=1 // pred_fallthru
      _
    %p23 = scmp.eq.s32.totalorder 0, 0
    // Predicated region
    $region10: #{tpu_custom_call.1} parent=1 // pred_check
      %p24 = pneg %p23
    $region11: #{tpu_custom_call.1} parent=1 // pred_check_branch
      %26 = sbr.rel (%p24) target = $region13
    $region12: #{tpu_custom_call.1} parent=1 // pred_region
      %27 = vst [vmem:[#allocation2] sm:$0x3] 0.0
    $region13: #{tpu_custom_call.1} parent=1 // pred_fallthru
      _
    %v28 = vld [vmem:[#allocation3] sm:$0x3]
    %v29 = vld [vmem:[#allocation3 + $0x2] sm:$0x3]
    %v30 = vld [vmem:[#allocation2] sm:$0x3]
    %vm31 = vcmask 1041408
    %v32 = vsel %vm31, %v28, 0.0
    %v33 = vrot.slane %v32, 4
    %v34 = vadd.f32 %v32, %v33
    %v35 = vrot.slane %v34, 2
    %v36 = vadd.f32 %v34, %v35
    %v37 = vrot.slane %v36, 1
    %v38 = vadd.f32 %v36, %v37
    %v39 = vsel %vm31, %v29, 0.0
    %v40 = vrot.slane %v39, 4
    %v41 = vadd.f32 %v39, %v40
    %v42 = vrot.slane %v41, 2
    %v43 = vadd.f32 %v41, %v42
    %v44 = vrot.slane %v43, 1
    %v45 = vadd.f32 %v43, %v44
    %vm48 = vcmask 1041409
    %v49 = vsel %vm48, %v45, %v38
    %v51 = vadd.f32 %v30, %v49
    %52 = vst [vmem:[#allocation2] sm:$0x3] %v51
    // Predicated region
    $region14: #{tpu_custom_call.1} parent=1 // pred_check
      %p53 = pneg %p23
    $region15: #{tpu_custom_call.1} parent=1 // pred_check_branch
      %55 = sbr.rel (%p53) target = $region17
    $region16: #{tpu_custom_call.1} parent=1 // pred_region
      %v56 = vld [vmem:[#allocation2] sm:$0x3]
      %58 = vrot.lane.b32.xlu0 %v56, 64
      %v59 = vpop.permute.xlu0 %58
      %v61 = vadd.f32 %v56, %v59
      %63 = vrot.lane.b32.xlu0 %v61, 96
      %v64 = vpop.permute.xlu0 %63
      %v66 = vadd.f32 %v61, %v64
      %v67 = vmul.f32 %v66, 0.125
      %vm68 = vcmask 254976
      %69 = vst.msk [vmem:[#allocation6] sm:$0x3] %vm68, %v67
    $region17: #{tpu_custom_call.1} parent=1 // pred_fallthru
      _
    // Predicated region
    $region18: #{tpu_custom_call.1} parent=1 // pred_check
      _
    $region19: #{tpu_custom_call.1} parent=1 // pred_check_branch
      %71 = sbr.rel (0) target = $region21
    $region20: #{tpu_custom_call.1} parent=1 // pred_region
      %s73 = ssub.s32 32, 32
      %74 = vsyncadd [#allocation5], %s73
      %s76 = sshll.u32 [#allocation6], 4
      %s77 = int_to_ptr.vmem [resolvable:$true] %s76
      %79 = dma.vmem_to_hbm [thread:$0]  %s77, 32, %s1, [#allocation5]
    $region21: #{tpu_custom_call.1} parent=1 // pred_fallthru
      _
    // Predicated region
    $region22: #{tpu_custom_call.1} parent=1 // pred_check
      _
    $region23: #{tpu_custom_call.1} parent=1 // pred_check_branch
      %81 = sbr.rel (0) target = $region25
    $region24: #{tpu_custom_call.1} parent=1 // pred_region
      %82 = dma.done [#allocation5], 32
    $region25: #{tpu_custom_call.1} parent=1 // pred_fallthru
      _
    %83 = vsyncpa [#allocation4], 1
    %84 = vsyncpa [#allocation5], 1

</llo_original>
